<compile_context>
chip_gen: v7x
topology: tpu7x:2x2x1
jax: 0.10.0
libtpu: 0.0.40
codegen_flags: <defaults>
</compile_context>

<pallas_src>
import functools

import jax
import jax.numpy as jnp
from jax.experimental import pallas as pl
from jax.experimental.pallas import tpu as pltpu


def _multihead_kernel(x_ref, w1_ref, scale_ref, shift_ref, w2_ref, b2_ref,
                      o_ref):
    # x_ref:     (B, 2F)        shared input
    # w1_ref:    (2F, H*F)      all heads' first-linear weights, stacked on lanes
    # scale_ref: (1, H*F)       fused BN scale  = gamma / sqrt(var + eps)
    # shift_ref: (1, H*F)       fused BN shift  = beta - mean*scale + b1*scale
    # w2_ref:    (H*F, H*N)     block-diagonal second-linear weights
    # b2_ref:    (1, H*N)
    # o_ref:     (B, H*N)       lane-dense output slab (head h in cols h*N:(h+1)*N)
    x = x_ref[...]

    # One MXU pass over all heads: (B, 2F) @ (2F, H*F) -> (B, H*F)
    h = jnp.dot(x, w1_ref[...], preferred_element_type=jnp.float32)

    # BatchNorm1d (eval) + Linear bias folded into a single per-feature affine.
    h = h * scale_ref[...] + shift_ref[...]

    # LeakyReLU, default negative_slope = 0.01
    h = jnp.where(h > 0, h, 0.01 * h)

    # Second MXU pass over all heads via block-diagonal weight:
    # (B, H*F) @ (H*F, H*N) -> (B, H*N)
    out = jnp.dot(h, w2_ref[...], preferred_element_type=jnp.float32)
    out = out + b2_ref[...]
    o_ref[...] = out.astype(o_ref.dtype)


@functools.partial(jax.jit, static_argnames=())
def multihead_forward(x, w1, b1, gamma, beta, running_mean, running_var,
                      w2, b2, eps=1e-5):
    """x: (B, 2F). Stacked per-head params: w1 (H,F,2F), b1 (H,F),
    BN params (H,F), w2 (H,N,F), b2 (H,N). Returns (H*B, N) matching
    torch.cat([head(x) for head in heads], dim=0)."""
    B, twoF = x.shape
    H, F, _ = w1.shape
    N = w2.shape[1]

    # --- host-side (XLA) parameter preparation: one-time layout plumbing ----
    # Fuse BatchNorm (eval) and the first linear bias into a single affine.
    scale = gamma / jnp.sqrt(running_var + eps)               # (H, F)
    shift = beta - running_mean * scale + b1 * scale          # (H, F)
    scale2 = scale.reshape(1, H * F)
    shift2 = shift.reshape(1, H * F)

    # Stack W1 with the contraction dim first: w1s[k, h*F+f] = w1[h, f, k].
    w1s = jnp.transpose(w1, (2, 0, 1)).reshape(twoF, H * F)   # (2F, H*F)

    # Block-diagonal W2 (contraction dim first):
    #   w2bd[h*F+f, g*N+n] = w2[h, n, f] if g == h else 0.
    w2t = jnp.transpose(w2, (0, 2, 1))                        # (H, F, N)
    eye = jnp.eye(H, dtype=w2.dtype)
    w2bd = jnp.einsum('hfn,hg->hfgn', w2t, eye).reshape(H * F, H * N)

    b2s = b2.reshape(1, H * N)

    # --- single fused pallas_call (everything fits VMEM comfortably) --------
    out_slab = pl.pallas_call(
        _multihead_kernel,
        out_shape=jax.ShapeDtypeStruct((B, H * N), jnp.float32),
        grid_spec=pltpu.PrefetchScalarGridSpec(
            num_scalar_prefetch=0,
            grid=(1,),
            in_specs=[
                pl.BlockSpec((B, twoF), lambda i: (0, 0)),        # x
                pl.BlockSpec((twoF, H * F), lambda i: (0, 0)),    # W1 stacked
                pl.BlockSpec((1, H * F), lambda i: (0, 0)),       # BN scale
                pl.BlockSpec((1, H * F), lambda i: (0, 0)),       # BN shift (+b1)
                pl.BlockSpec((H * F, H * N), lambda i: (0, 0)),   # W2 block-diag
                pl.BlockSpec((1, H * N), lambda i: (0, 0)),       # b2
            ],
            out_specs=pl.BlockSpec((B, H * N), lambda i: (0, 0)),
        ),
        compiler_params=pltpu.CompilerParams(
            dimension_semantics=("arbitrary",)),
    )(x, w1s, scale2, shift2, w2bd, b2s)

    # Recover torch.cat(dim=0) layout: row h*B + b <- out_slab[b, h*N:(h+1)*N].
    out = out_slab.reshape(B, H, N).transpose(1, 0, 2).reshape(H * B, N)
    return out


def _reference(x, w1, b1, gamma, beta, running_mean, running_var, w2, b2,
               eps=1e-5):
    """Pure-JAX reference mirroring the PyTorch eval-mode forward."""
    outs = []
    H = w1.shape[0]
    for h in range(H):
        y = x @ w1[h].T + b1[h]
        y = gamma[h] * (y - running_mean[h]) / jnp.sqrt(running_var[h] + eps) \
            + beta[h]
        y = jnp.where(y > 0, y, 0.01 * y)
        y = y @ w2[h].T + b2[h]
        outs.append(y)
    return jnp.concatenate(outs, axis=0)


if __name__ == "__main__":
    # Small shapes consistent with MultiHead(feat_dim=32, n_classes=[16,16,16])
    B = 8          # batch
    F = 32         # feat_dim
    N = 16         # n_classes per head (must match for torch.cat(dim=0))
    H = 3          # number of heads

    key = jax.random.PRNGKey(0)
    ks = jax.random.split(key, 8)

    x = jax.random.normal(ks[0], (B, 2 * F), dtype=jnp.float32)

    # Deterministic parameter init (stacked per head).
    w1 = jax.random.normal(ks[1], (H, F, 2 * F), dtype=jnp.float32) * 0.05
    b1 = jax.random.normal(ks[2], (H, F), dtype=jnp.float32) * 0.05
    gamma = 1.0 + 0.1 * jax.random.normal(ks[3], (H, F), dtype=jnp.float32)
    beta = 0.1 * jax.random.normal(ks[4], (H, F), dtype=jnp.float32)
    running_mean = 0.1 * jax.random.normal(ks[5], (H, F), dtype=jnp.float32)
    running_var = jnp.abs(1.0 + 0.1 * jax.random.normal(ks[6], (H, F),
                                                        dtype=jnp.float32))
    w2 = jax.random.normal(ks[7], (H, N, F), dtype=jnp.float32) * 0.05
    b2 = jnp.linspace(-0.1, 0.1, H * N, dtype=jnp.float32).reshape(H, N)

    out = multihead_forward(x, w1, b1, gamma, beta, running_mean, running_var,
                            w2, b2)
    out = jax.block_until_ready(out)

    ref = _reference(x, w1, b1, gamma, beta, running_mean, running_var, w2, b2)
    assert out.shape == (H * B, N), out.shape
    assert jnp.allclose(out, ref, atol=1e-4, rtol=1e-4), \
        float(jnp.max(jnp.abs(out - ref)))

    print("KERNEL_OK")
</pallas_src>

<mosaic_0001>
module attributes {stable_mosaic.version = 11 : i64} {
  func.func @_multihead_kernel(%arg0: i32, %arg1: memref<8x64xf32, #tpu.memory_space<vmem>>, %arg2: memref<64x96xf32, #tpu.memory_space<vmem>>, %arg3: memref<1x96xf32, #tpu.memory_space<vmem>>, %arg4: memref<1x96xf32, #tpu.memory_space<vmem>>, %arg5: memref<96x48xf32, #tpu.memory_space<vmem>>, %arg6: memref<1x48xf32, #tpu.memory_space<vmem>>, %arg7: memref<8x48xf32, #tpu.memory_space<vmem>>) attributes {dimension_semantics = [#tpu.dimension_semantics<arbitrary>], iteration_bounds = array<i64: 1>, scalar_prefetch = 0 : i64, scratch_operands = 0 : i64, tpu.core_type = #tpu.core_type<tc>, window_params = [{pipeline_mode = #tpu.pipeline_mode<synchronous>, transform_indices = @transform_0, window_bounds = array<i64: 8, 64>}, {pipeline_mode = #tpu.pipeline_mode<synchronous>, transform_indices = @transform_1, window_bounds = array<i64: 64, 96>}, {pipeline_mode = #tpu.pipeline_mode<synchronous>, transform_indices = @transform_2, window_bounds = array<i64: 1, 96>}, {pipeline_mode = #tpu.pipeline_mode<synchronous>, transform_indices = @transform_3, window_bounds = array<i64: 1, 96>}, {pipeline_mode = #tpu.pipeline_mode<synchronous>, transform_indices = @transform_4, window_bounds = array<i64: 96, 48>}, {pipeline_mode = #tpu.pipeline_mode<synchronous>, transform_indices = @transform_5, window_bounds = array<i64: 1, 48>}, {pipeline_mode = #tpu.pipeline_mode<synchronous>, transform_indices = @transform_6, window_bounds = array<i64: 8, 48>}]} {
    %c0 = arith.constant 0 : index
    %c0_0 = arith.constant 0 : index
    %0 = vector.load %arg1[%c0, %c0_0] : memref<8x64xf32, #tpu.memory_space<vmem>>, vector<8x64xf32>
    %c0_1 = arith.constant 0 : index
    %c0_2 = arith.constant 0 : index
    %1 = vector.load %arg2[%c0_1, %c0_2] : memref<64x96xf32, #tpu.memory_space<vmem>>, vector<64x96xf32>
    %cst = arith.constant dense<0.000000e+00> : vector<8x96xf32>
    %2 = tpu.matmul %0, %1, %cst {dimension_numbers = #tpu.dot_dimension_numbers<[1], [0], [0], [1], [0, 0, 1, 1], [], []>} : vector<8x64xf32>, vector<64x96xf32>, vector<8x96xf32> -> vector<8x96xf32>
    %c0_3 = arith.constant 0 : index
    %c0_4 = arith.constant 0 : index
    %3 = vector.load %arg3[%c0_3, %c0_4] : memref<1x96xf32, #tpu.memory_space<vmem>>, vector<1x96xf32>
    %4 = vector.broadcast %3 : vector<1x96xf32> to vector<8x96xf32>
    %5 = arith.mulf %2, %4 : vector<8x96xf32>
    %c0_5 = arith.constant 0 : index
    %c0_6 = arith.constant 0 : index
    %6 = vector.load %arg4[%c0_5, %c0_6] : memref<1x96xf32, #tpu.memory_space<vmem>>, vector<1x96xf32>
    %7 = vector.broadcast %6 : vector<1x96xf32> to vector<8x96xf32>
    %8 = arith.addf %5, %7 : vector<8x96xf32>
    %cst_7 = arith.constant 0.000000e+00 : f32
    %9 = vector.broadcast %cst_7 : f32 to vector<8x96xf32>
    %10 = arith.cmpf ogt, %8, %9 : vector<8x96xf32>
    %cst_8 = arith.constant 0.00999999977 : f32
    %11 = vector.broadcast %cst_8 : f32 to vector<8x96xf32>
    %12 = arith.mulf %11, %8 : vector<8x96xf32>
    %13 = arith.select %10, %8, %12 : vector<8x96xi1>, vector<8x96xf32>
    %c0_9 = arith.constant 0 : index
    %c0_10 = arith.constant 0 : index
    %14 = vector.load %arg5[%c0_9, %c0_10] : memref<96x48xf32, #tpu.memory_space<vmem>>, vector<96x48xf32>
    %cst_11 = arith.constant dense<0.000000e+00> : vector<8x48xf32>
    %15 = tpu.matmul %13, %14, %cst_11 {dimension_numbers = #tpu.dot_dimension_numbers<[1], [0], [0], [1], [0, 0, 1, 1], [], []>} : vector<8x96xf32>, vector<96x48xf32>, vector<8x48xf32> -> vector<8x48xf32>
    %c0_12 = arith.constant 0 : index
    %c0_13 = arith.constant 0 : index
    %16 = vector.load %arg6[%c0_12, %c0_13] : memref<1x48xf32, #tpu.memory_space<vmem>>, vector<1x48xf32>
    %17 = vector.broadcast %16 : vector<1x48xf32> to vector<8x48xf32>
    %18 = arith.addf %15, %17 : vector<8x48xf32>
    %c0_14 = arith.constant 0 : index
    %c0_15 = arith.constant 0 : index
    %19 = vector.load %arg7[%c0_14, %c0_15] : memref<8x48xf32, #tpu.memory_space<vmem>>, vector<8x48xf32>
    tpu.vector_store %arg7[%c0_14, %c0_15], %18 {strides = array<i32>} : memref<8x48xf32, #tpu.memory_space<vmem>>, vector<8x48xf32>,
    return
  }
  func.func @transform_0(%arg0: i32) -> (i32, i32) {
    %c0_i32 = arith.constant 0 : i32
    %c0_i32_0 = arith.constant 0 : i32
    %c0_i32_1 = arith.constant 0 : i32
    return %c0_i32, %c0_i32_0 : i32, i32
  }
  func.func @transform_1(%arg0: i32) -> (i32, i32) {
    %c0_i32 = arith.constant 0 : i32
    %c0_i32_0 = arith.constant 0 : i32
    %c0_i32_1 = arith.constant 0 : i32
    return %c0_i32, %c0_i32_0 : i32, i32
  }
  func.func @transform_2(%arg0: i32) -> (i32, i32) {
    %c0_i32 = arith.constant 0 : i32
    %c0_i32_0 = arith.constant 0 : i32
    %c0_i32_1 = arith.constant 0 : i32
    return %c0_i32, %c0_i32_0 : i32, i32
  }
  func.func @transform_3(%arg0: i32) -> (i32, i32) {
    %c0_i32 = arith.constant 0 : i32
    %c0_i32_0 = arith.constant 0 : i32
    %c0_i32_1 = arith.constant 0 : i32
    return %c0_i32, %c0_i32_0 : i32, i32
  }
  func.func @transform_4(%arg0: i32) -> (i32, i32) {
    %c0_i32 = arith.constant 0 : i32
    %c0_i32_0 = arith.constant 0 : i32
    %c0_i32_1 = arith.constant 0 : i32
    return %c0_i32, %c0_i32_0 : i32, i32
  }
  func.func @transform_5(%arg0: i32) -> (i32, i32) {
    %c0_i32 = arith.constant 0 : i32
    %c0_i32_0 = arith.constant 0 : i32
    %c0_i32_1 = arith.constant 0 : i32
    return %c0_i32, %c0_i32_0 : i32, i32
  }
  func.func @transform_6(%arg0: i32) -> (i32, i32) {
    %c0_i32 = arith.constant 0 : i32
    %c0_i32_0 = arith.constant 0 : i32
    %c0_i32_1 = arith.constant 0 : i32
    return %c0_i32, %c0_i32_0 : i32, i32
  }
}

</mosaic_0001>

<llo_original>
// kernel: multihead_forward.1
$region0: #{multihead_forward.1}
  #allocation0 [shape = 'u32[]', space=smem, size = 0x4, offset = 0x4, fixed_abs, tag = 'smem constant byte address 0x4 - core index']
  #allocation1 [shape = 'u32[144,128]{1,0:T(1,128)}', space=vmem, size = 0x12000, scoped, tag = 'internal scratch']
  %s0 = inlined_call_operand.vmem [shape: f32[8,64], index: 0, kind: input, shape index: {}]
  %s1 = inlined_call_operand.vmem [shape: f32[64,96], index: 1, kind: input, shape index: {}]
  %s2 = inlined_call_operand.vmem [shape: f32[1,96], index: 2, kind: input, shape index: {}]
  %s3 = inlined_call_operand.vmem [shape: f32[1,96], index: 3, kind: input, shape index: {}]
  %s4 = inlined_call_operand.vmem [shape: f32[96,48], index: 4, kind: input, shape index: {}]
  %s5 = inlined_call_operand.vmem [shape: f32[1,48], index: 5, kind: input, shape index: {}]
  %s6 = inlined_call_operand.vmem [shape: f32[8,48], index: 6, kind: output, shape index: {}]
  %s7 = sld [smem:[#allocation0]]
  $region34: #{multihead_forward.1} parent=0
    _
  %s9 = ssub.s32 1, %s7
  %s10 = scalar_select 0, %s9, %s7
  // Predicated region
  $region2: #{multihead_forward.1} parent=0 // pred_check
    _
  $region3: #{multihead_forward.1} parent=0 // pred_check_branch
    %12 = sbr.rel (0) target = $region5
  $region4: #{multihead_forward.1} parent=0 // pred_region
    _
  $region5: #{multihead_forward.1} parent=0 // pred_fallthru
    _
  // Predicated region
  $region6: #{multihead_forward.1} parent=0 // pred_check
    _
  $region7: #{multihead_forward.1} parent=0 // pred_check_branch
    %14 = sbr.rel (0) target = $region9
  $region8: #{multihead_forward.1} parent=0 // pred_region
    _
  $region9: #{multihead_forward.1} parent=0 // pred_fallthru
    _
  // Predicated region
  $region10: #{multihead_forward.1} parent=0 // pred_check
    _
  $region11: #{multihead_forward.1} parent=0 // pred_check_branch
    %16 = sbr.rel (0) target = $region13
  $region12: #{multihead_forward.1} parent=0 // pred_region
    _
  $region13: #{multihead_forward.1} parent=0 // pred_fallthru
    _
  // Predicated region
  $region14: #{multihead_forward.1} parent=0 // pred_check
    _
  $region15: #{multihead_forward.1} parent=0 // pred_check_branch
    %18 = sbr.rel (0) target = $region17
  $region16: #{multihead_forward.1} parent=0 // pred_region
    _
  $region17: #{multihead_forward.1} parent=0 // pred_fallthru
    _
  // Predicated region
  $region18: #{multihead_forward.1} parent=0 // pred_check
    _
  $region19: #{multihead_forward.1} parent=0 // pred_check_branch
    %20 = sbr.rel (0) target = $region21
  $region20: #{multihead_forward.1} parent=0 // pred_region
    _
  $region21: #{multihead_forward.1} parent=0 // pred_fallthru
    _
  // Predicated region
  $region22: #{multihead_forward.1} parent=0 // pred_check
    _
  $region23: #{multihead_forward.1} parent=0 // pred_check_branch
    %22 = sbr.rel (0) target = $region25
  $region24: #{multihead_forward.1} parent=0 // pred_region
    _
  $region25: #{multihead_forward.1} parent=0 // pred_fallthru
    _
  %v23 = vld [vmem:[%s0] sm:$0xff]
  %v24 = vld [vmem:[%s1] sm:$0xff]
  %v25 = vld [vmem:[%s1 + $0x8] sm:$0xff]
  %v26 = vld [vmem:[%s1 + $0x10] sm:$0xff]
  %v27 = vld [vmem:[%s1 + $0x18] sm:$0xff]
  %v28 = vld [vmem:[%s1 + $0x20] sm:$0xff]
  %v29 = vld [vmem:[%s1 + $0x28] sm:$0xff]
  %v30 = vld [vmem:[%s1 + $0x30] sm:$0xff]
  %v31 = vld [vmem:[%s1 + $0x38] sm:$0xff]
  %vm32 = vcmask 523264
  %v34 = vsel %vm32, %v23, 0
  %36 = vmatprep.subr.mxu0 0.0
  %37 = vmatpush1.msra.mxu0 %v24
  %38 = vmatprep.subr.mxu0 0.0
  %39 = vmatpush1.msra.mxu0 %v25
  %40 = vmatprep.subr.mxu0 0.0
  %41 = vmatpush1.msra.mxu0 %v26
  %42 = vmatprep.subr.mxu0 0.0
  %43 = vmatpush1.msra.mxu0 %v27
  %44 = vmatprep.subr.mxu0 0.0
  %45 = vmatpush1.msra.mxu0 %v28
  %46 = vmatprep.subr.mxu0 0.0
  %47 = vmatpush1.msra.mxu0 %v29
  %48 = vmatprep.subr.mxu0 0.0
  %49 = vmatpush1.msra.mxu0 %v30
  %50 = vmatprep.subr.mxu0 0.0
  %51 = vmatpush1.msra.mxu0 %v31
  %52 = vmatprep.subr.mxu0 0.0
  %53 = vmatpush1.msra.mxu0 0.0
  %54 = vmatprep.subr.mxu0 0.0
  %55 = vmatpush1.msra.mxu0 0.0
  %56 = vmatprep.subr.mxu0 0.0
  %57 = vmatpush1.msra.mxu0 0.0
  %58 = vmatprep.subr.mxu0 0.0
  %59 = vmatpush1.msra.mxu0 0.0
  %60 = vmatprep.subr.mxu0 0.0
  %61 = vmatpush1.msra.mxu0 0.0
  %62 = vmatprep.subr.mxu0 0.0
  %63 = vmatpush1.msra.mxu0 0.0
  %64 = vmatprep.subr.mxu0 0.0
  %65 = vmatpush1.msra.mxu0 0.0
  %66 = vmatprep.subr.mxu0 0.0
  %67 = vmatpush1.msra.mxu0 0.0
  %68 = vmatprep.subr.mxu0 0.0
  %69 = vmatpush1.msra.mxu0 0.0
  %70 = vmatprep.subr.mxu0 0.0
  %71 = vmatpush1.msra.mxu0 0.0
  %72 = vmatprep.subr.mxu0 0.0
  %73 = vmatpush1.msra.mxu0 0.0
  %74 = vmatprep.subr.mxu0 0.0
  %75 = vmatpush1.msra.mxu0 0.0
  %76 = vmatprep.subr.mxu0 0.0
  %77 = vmatpush1.msra.mxu0 0.0
  %78 = vmatprep.subr.mxu0 0.0
  %79 = vmatpush1.msra.mxu0 0.0
  %80 = vmatprep.subr.mxu0 0.0
  %81 = vmatpush1.msra.mxu0 0.0
  %82 = vmatprep.subr.mxu0 0.0
  %83 = vmatpush1.msra.mxu0 0.0
  %84 = vmatprep.subr.mxu0 0.0
  %85 = vmatpush1.msra.mxu0 0.0
  %86 = vmatprep.subr.mxu0 0.0
  %87 = vmatpush1.msra.mxu0 0.0
  %88 = vmatprep.subr.mxu0 0.0
  %89 = vmatpush1.msra.mxu0 0.0
  %90 = vmatprep.subr.mxu0 0.0
  %91 = vmatpush1.msra.mxu0 0.0
  %92 = vmatprep.subr.mxu0 0.0
  %93 = vmatpush1.msra.mxu0 0.0
  %94 = vmatprep.subr.mxu0 0.0
  %95 = vmatpush1.msra.mxu0 0.0
  %96 = vmatprep.subr.mxu0 0.0
  %97 = vmatpush1.msra.mxu0 0.0
  %98 = vmatprep.subr.mxu0 0.0
  %99 = vmatpush1.msra.mxu0 0.0
  %100 = vmatprep.mubr.f32.mxu0 0.0
  %101 = vmatmul.mubr.f32.gmra.mrb[0].mxu0 %v34
  %v102 = vpop.f32.mrb[0].mxu0
  %v103 = vadd.f32 0.0, %v102
  %v104 = vpop.f32.mrb[0].mxu0
  %105 = vdwg.mxu0
  %v106 = vld [vmem:[%s2] sm:$0x1]
  %v108 = vlaneseq
  %v109 = vshrl.u32 %v108, 7
  %v110 = vsub.s32 0, %v109
  %v111 = vrot.slane %v106, %v110
  %v113 = vmul.f32 %v103, %v111
  %v114 = vld [vmem:[%s3] sm:$0x1]
  %v116 = vlaneseq
  %v117 = vshrl.u32 %v116, 7
  %v118 = vsub.s32 0, %v117
  %v119 = vrot.slane %v114, %v118
  %v121 = vadd.f32 %v113, %v119
  %vm122 = vcmp.gt.f32.partialorder %v121, 0.0
  %v123 = vmul.f32 %v121, 0.01
  %v124 = vsel %vm122, %v121, %v123
  %v125 = vld [vmem:[%s4] sm:$0xff]
  %v126 = vld [vmem:[%s4 + $0x8] sm:$0xff]
  %v127 = vld [vmem:[%s4 + $0x10] sm:$0xff]
  %v128 = vld [vmem:[%s4 + $0x18] sm:$0xff]
  %v129 = vld [vmem:[%s4 + $0x20] sm:$0xff]
  %v130 = vld [vmem:[%s4 + $0x28] sm:$0xff]
  %v131 = vld [vmem:[%s4 + $0x30] sm:$0xff]
  %v132 = vld [vmem:[%s4 + $0x38] sm:$0xff]
  %v133 = vld [vmem:[%s4 + $0x40] sm:$0xff]
  %v134 = vld [vmem:[%s4 + $0x48] sm:$0xff]
  %v135 = vld [vmem:[%s4 + $0x50] sm:$0xff]
  %v136 = vld [vmem:[%s4 + $0x58] sm:$0xff]
  %v137 = vld [vmem:[%s5] sm:$0x1]
  %v139 = vlaneseq
  %v140 = vshrl.u32 %v139, 7
  %v141 = vsub.s32 0, %v140
  %v142 = vrot.slane %v137, %v141
  %vm144 = vcmask 785408
  %v146 = vsel %vm144, %v124, 0
  %148 = vmatprep.subr.mxu0 0.0
  %149 = vmatpush1.msra.mxu0 %v125
  %150 = vmatprep.subr.mxu0 0.0
  %151 = vmatpush1.msra.mxu0 %v126
  %152 = vmatprep.subr.mxu0 0.0
  %153 = vmatpush1.msra.mxu0 %v127
  %154 = vmatprep.subr.mxu0 0.0
  %155 = vmatpush1.msra.mxu0 %v128
  %156 = vmatprep.subr.mxu0 0.0
  %157 = vmatpush1.msra.mxu0 %v129
  %158 = vmatprep.subr.mxu0 0.0
  %159 = vmatpush1.msra.mxu0 %v130
  %160 = vmatprep.subr.mxu0 0.0
  %161 = vmatpush1.msra.mxu0 %v131
  %162 = vmatprep.subr.mxu0 0.0
  %163 = vmatpush1.msra.mxu0 %v132
  %164 = vmatprep.subr.mxu0 0.0
  %165 = vmatpush1.msra.mxu0 %v133
  %166 = vmatprep.subr.mxu0 0.0
  %167 = vmatpush1.msra.mxu0 %v134
  %168 = vmatprep.subr.mxu0 0.0
  %169 = vmatpush1.msra.mxu0 %v135
  %170 = vmatprep.subr.mxu0 0.0
  %171 = vmatpush1.msra.mxu0 %v136
  %172 = vmatprep.subr.mxu0 0.0
  %173 = vmatpush1.msra.mxu0 0.0
  %174 = vmatprep.subr.mxu0 0.0
  %175 = vmatpush1.msra.mxu0 0.0
  %176 = vmatprep.subr.mxu0 0.0
  %177 = vmatpush1.msra.mxu0 0.0
  %178 = vmatprep.subr.mxu0 0.0
  %179 = vmatpush1.msra.mxu0 0.0
  %180 = vmatprep.subr.mxu0 0.0
  %181 = vmatpush1.msra.mxu0 0.0
  %182 = vmatprep.subr.mxu0 0.0
  %183 = vmatpush1.msra.mxu0 0.0
  %184 = vmatprep.subr.mxu0 0.0
  %185 = vmatpush1.msra.mxu0 0.0
  %186 = vmatprep.subr.mxu0 0.0
  %187 = vmatpush1.msra.mxu0 0.0
  %188 = vmatprep.subr.mxu0 0.0
  %189 = vmatpush1.msra.mxu0 0.0
  %190 = vmatprep.subr.mxu0 0.0
  %191 = vmatpush1.msra.mxu0 0.0
  %192 = vmatprep.subr.mxu0 0.0
  %193 = vmatpush1.msra.mxu0 0.0
  %194 = vmatprep.subr.mxu0 0.0
  %195 = vmatpush1.msra.mxu0 0.0
  %196 = vmatprep.subr.mxu0 0.0
  %197 = vmatpush1.msra.mxu0 0.0
  %198 = vmatprep.subr.mxu0 0.0
  %199 = vmatpush1.msra.mxu0 0.0
  %200 = vmatprep.subr.mxu0 0.0
  %201 = vmatpush1.msra.mxu0 0.0
  %202 = vmatprep.subr.mxu0 0.0
  %203 = vmatpush1.msra.mxu0 0.0
  %204 = vmatprep.subr.mxu0 0.0
  %205 = vmatpush1.msra.mxu0 0.0
  %206 = vmatprep.subr.mxu0 0.0
  %207 = vmatpush1.msra.mxu0 0.0
  %208 = vmatprep.subr.mxu0 0.0
  %209 = vmatpush1.msra.mxu0 0.0
  %210 = vmatprep.subr.mxu0 0.0
  %211 = vmatpush1.msra.mxu0 0.0
  %212 = vmatprep.mubr.f32.mxu0 0.0
  %213 = vmatmul.mubr.f32.gmra.mrb[0].mxu0 %v146
  %v214 = vpop.f32.mrb[0].mxu0
  %v215 = vadd.f32 %v142, %v214
  %v216 = vpop.f32.mrb[0].mxu0
  %217 = vdwg.mxu0
  %vm218 = vcmask 392192
  %219 = vst.msk [vmem:[%s6] sm:$0xff] %vm218, %v215
  // Predicated region
  $region26: #{multihead_forward.1} parent=0 // pred_check
    _
  $region27: #{multihead_forward.1} parent=0 // pred_check_branch
    %221 = sbr.rel (0) target = $region29
  $region28: #{multihead_forward.1} parent=0 // pred_region
    _
  $region29: #{multihead_forward.1} parent=0 // pred_fallthru
    _
  // Predicated region
  $region30: #{multihead_forward.1} parent=0 // pred_check
    _
  $region31: #{multihead_forward.1} parent=0 // pred_check_branch
    %223 = sbr.rel (0) target = $region33
  $region32: #{multihead_forward.1} parent=0 // pred_region
    _
  $region33: #{multihead_forward.1} parent=0 // pred_fallthru
    _

</llo_original>
